<compile_context>
chip_gen: v6e
topology: v6e:2x2x1
jax: 0.10.0
libtpu: 0.0.40
codegen_flags: <defaults>
</compile_context>

<pallas_src>
import jax
import jax.numpy as jnp
from jax import lax
from jax.experimental import pallas as pl
from jax.experimental.pallas import tpu as pltpu


# ---------------------------------------------------------------------------
# Pallas kernel: fused pointwise matmul + two dilated depthwise convs.
# Operates on a (Nb, C, L) block in the native layout.
# ---------------------------------------------------------------------------
def _interstock_kernel(x_ref, w_ref, b_ref,
                       dw1_w_ref, dw1_b_ref, dw2_w_ref, dw2_b_ref,
                       z_ref):
    Nb, C, L = x_ref.shape

    W = w_ref[...]            # (C, C)  bf16 fused pointwise weight
    b = b_ref[...]            # (C, 1)  f32 fused bias
    dw1_w = dw1_w_ref[...]    # (C, 3)  f32
    dw1_b = dw1_b_ref[...]    # (C, 1)
    dw2_w = dw2_w_ref[...]
    dw2_b = dw2_b_ref[...]

    # 'same'-padding masks for the dilated taps: one sublane row each,
    # computed once per block and broadcast over (C, L) inside jnp.where.
    pos = lax.broadcasted_iota(jnp.int32, (1, L), 1)
    lmask2, rmask2 = pos >= 2, pos < L - 2
    lmask4, rmask4 = pos >= 4, pos < L - 4

    def depthwise(v, w, bb, d, lmask, rmask):
        # depthwise Conv1d, k=3, dilation=d, padding='same':
        #   out[c, t] = w[c,0]*v[c,t-d] + w[c,1]*v[c,t] + w[c,2]*v[c,t+d] + b[c]
        # Shifts via XLU lane rotation (separate issue slot from the VPU FMAs);
        # masks zero the wrapped-around elements -> exact 'same' padding.
        left = jnp.where(lmask, pltpu.roll(v, shift=d, axis=1), 0.0)       # v[:, t-d]
        right = jnp.where(rmask, pltpu.roll(v, shift=L - d, axis=1), 0.0)  # v[:, t+d]
        return w[:, 0:1] * left + w[:, 1:2] * v + w[:, 2:3] * right + bb

    # Nb is a small static count; each iteration is one MXU matmul + VPU chain
    # whose results are stored immediately (no live ranges across iterations).
    for n in range(Nb):
        xn = x_ref[n]                                          # (C, L) bf16
        # Fused pointwise1∘pointwise2: bf16 operands, f32 accumulation.
        y = jnp.dot(W, xn, preferred_element_type=jnp.float32) + b
        y1 = depthwise(y, dw1_w, dw1_b, 2, lmask2, rmask2)
        y2 = depthwise(y1, dw2_w, dw2_b, 4, lmask4, rmask4)
        # torch.cat([y1, y2], dim=1): two lane-aligned stores.
        z_ref[n, 0:C, :] = y1.astype(z_ref.dtype)
        z_ref[n, C:2 * C, :] = y2.astype(z_ref.dtype)


# ---------------------------------------------------------------------------
# Wrapper: tiling policy + BlockSpecs / grid (no host-side transposes).
# ---------------------------------------------------------------------------
def interstock_forward(x, params, *, batch_per_step=None, out_dtype=None):
    (W, b, dw1_w, dw1_b, dw2_w, dw2_b) = params
    N, C, L = x.shape
    if out_dtype is None:
        out_dtype = x.dtype   # keep f32 output by default; pass bf16 to halve
                              # output HBM traffic if downstream tolerates it.

    # bf16 input halves input DMA bytes; the MXU operands are bf16 anyway.
    x = x.astype(jnp.bfloat16)

    if batch_per_step is None:
        # Aim for a few thousand lane columns per step while keeping at least
        # 2 grid steps so the 'parallel' axis can feed both v7x TensorCores.
        # (For the toy test N=2, L=128 this picks Nb=1 -> grid=(2,).)
        # At production sizes also re-budget per-step VMEM: double-buffered
        # I/O is ~2*(C+2C)*Nb*L*bytes plus a few live (C,L) f32 temporaries;
        # v7x has only 64 MiB physical / 32 MiB default scoped VMEM, v5e has
        # 16 MiB default scoped -> cap Nb*L or set vmem_limit_bytes.
        target_cols = 4096
        nb = max(1, min(N, max(1, target_cols // max(L, 1))))
        if nb > 1 and N // nb < 2:
            nb = max(1, N // 2)
        while N % nb != 0:
            nb -= 1
        batch_per_step = nb
    assert N % batch_per_step == 0
    Nb = batch_per_step
    grid = (N // Nb,)

    def const_spec(arr):
        # whole-array block, broadcast across the grid axis (tiny params)
        return pl.BlockSpec(arr.shape, lambda i: (0,) * arr.ndim)

    grid_spec = pltpu.PrefetchScalarGridSpec(
        num_scalar_prefetch=0,
        grid=grid,
        in_specs=[
            # Native layout: block (Nb, C, L), grid over the batch axis.
            # If profiling at scale shows exposed DMA, add
            # pipeline_mode=pl.Buffered(3) here.
            pl.BlockSpec((Nb, C, L), lambda i: (i, 0, 0)),
            const_spec(W), const_spec(b),
            const_spec(dw1_w), const_spec(dw1_b),
            const_spec(dw2_w), const_spec(dw2_b),
        ],
        out_specs=pl.BlockSpec((Nb, 2 * C, L), lambda i: (i, 0, 0)),
    )

    return pl.pallas_call(
        _interstock_kernel,
        out_shape=jax.ShapeDtypeStruct((N, 2 * C, L), out_dtype),
        grid_spec=grid_spec,
        compiler_params=pltpu.CompilerParams(
            dimension_semantics=("parallel",)),
    )(x, W, b, dw1_w, dw1_b, dw2_w, dw2_b)


# ---------------------------------------------------------------------------
# Parameter construction (PyTorch-shaped) + conversion to kernel params.
# ---------------------------------------------------------------------------
def grouped_pointwise_to_dense(w_grouped, groups):
    """(C_out, C_in//G, 1) grouped 1x1 conv weight -> block-diagonal (C, C)."""
    c_out, cpg, _ = w_grouped.shape
    out_per_g = c_out // groups
    dense = jnp.zeros((c_out, c_out), w_grouped.dtype)
    for g in range(groups):
        rows = slice(g * out_per_g, (g + 1) * out_per_g)
        cols = slice(g * cpg, (g + 1) * cpg)
        dense = dense.at[rows, cols].set(w_grouped[rows, :, 0])
    return dense


def make_torch_like_params(key, C, groups1, groups2):
    ks = jax.random.split(key, 8)
    s = 0.1
    pw1 = s * jax.random.normal(ks[0], (C, C // groups1, 1), jnp.float32)
    pb1 = s * jax.random.normal(ks[1], (C,), jnp.float32)
    pw2 = s * jax.random.normal(ks[2], (C, C // groups2, 1), jnp.float32)
    pb2 = s * jax.random.normal(ks[3], (C,), jnp.float32)
    dw1_w = s * jax.random.normal(ks[4], (C, 1, 3), jnp.float32)
    dw1_b = s * jax.random.normal(ks[5], (C,), jnp.float32)
    dw2_w = s * jax.random.normal(ks[6], (C, 1, 3), jnp.float32)
    dw2_b = s * jax.random.normal(ks[7], (C,), jnp.float32)
    return (pw1, pb1, pw2, pb2, dw1_w, dw1_b, dw2_w, dw2_b)


def prepare_kernel_params(torch_params, groups1, groups2):
    (pw1, pb1, pw2, pb2, dw1_w, dw1_b, dw2_w, dw2_b) = torch_params
    C = pw1.shape[0]
    W1 = grouped_pointwise_to_dense(pw1, groups1)     # (C, C) block-diagonal
    W2 = grouped_pointwise_to_dense(pw2, groups2)     # (C, C) block-diagonal
    # Algebraic fusion: pointwise2(pointwise1(x)) = (W2 W1) x + (W2 b1 + b2).
    # (At large production C, W2 W1 stays block-diagonal; dense W only costs
    #  extra MXU flops, which is acceptable while the kernel is memory-bound.)
    W = W2 @ W1
    b = W2 @ pb1.reshape(C, 1) + pb2.reshape(C, 1)
    return (W.astype(jnp.bfloat16),                   # bf16 MXU operand
            b,                                        # f32 fused bias (C,1)
            dw1_w[:, 0, :], dw1_b.reshape(C, 1),
            dw2_w[:, 0, :], dw2_b.reshape(C, 1))


# ---------------------------------------------------------------------------
# Pure-JAX reference (same math / quantization as the kernel) for validation.
# ---------------------------------------------------------------------------
def interstock_reference(x, params):
    (W, b, dw1_w, dw1_b, dw2_w, dw2_b) = params
    # Same operand quantization as the kernel (bf16 operands, f32 math).
    Wf = W.astype(jnp.float32)
    xf = x.astype(jnp.bfloat16).astype(jnp.float32)
    y = jnp.einsum("ij,njl->nil", Wf, xf) + b[None]

    def dw(v, w, bb, d):
        Nn, Cc, Ll = v.shape
        zp = jnp.zeros((Nn, Cc, d), v.dtype)
        left = jnp.concatenate([zp, v[:, :, : Ll - d]], axis=2)
        right = jnp.concatenate([v[:, :, d:], zp], axis=2)
        return (w[None, :, 0:1] * left + w[None, :, 1:2] * v
                + w[None, :, 2:3] * right + bb[None])

    y1 = dw(y, dw1_w, dw1_b, 2)
    y2 = dw(y1, dw2_w, dw2_b, 4)
    return jnp.concatenate([y1, y2], axis=1)


if __name__ == "__main__":
    # Small shapes consistent with the module's structure: channel count must
    # be divisible by both pointwise group counts; L > 2*max_dilation.
    N, C, L = 2, 16, 128
    GROUPS1, GROUPS2 = 4, 8

    key = jax.random.PRNGKey(0)
    kx, kp = jax.random.split(key)
    x = jax.random.normal(kx, (N, C, L), jnp.float32)
    torch_params = make_torch_like_params(kp, C, GROUPS1, GROUPS2)
    params = prepare_kernel_params(torch_params, GROUPS1, GROUPS2)

    z = interstock_forward(x, params)
    z = jax.block_until_ready(z)

    z_ref = interstock_reference(x, params)
    assert z.shape == (N, 2 * C, L)
    err = float(jnp.max(jnp.abs(z.astype(jnp.float32) - z_ref)))
    assert err < 2e-3, err

    # TODO(synk): self.act (GELU) and self.norm (LayerNorm) are constructed in
    # __init__ but never used in forward(), so they are intentionally omitted.
    print("KERNEL_OK")
</pallas_src>

<mosaic_0001>
module attributes {stable_mosaic.version = 11 : i64} {
  func.func @_interstock_kernel(%arg0: i32, %arg1: memref<1x16x128xbf16, #tpu.memory_space<vmem>>, %arg2: memref<16x16xbf16, #tpu.memory_space<vmem>>, %arg3: memref<16x1xf32, #tpu.memory_space<vmem>>, %arg4: memref<16x3xf32, #tpu.memory_space<vmem>>, %arg5: memref<16x1xf32, #tpu.memory_space<vmem>>, %arg6: memref<16x3xf32, #tpu.memory_space<vmem>>, %arg7: memref<16x1xf32, #tpu.memory_space<vmem>>, %arg8: memref<1x32x128xf32, #tpu.memory_space<vmem>>) attributes {dimension_semantics = [#tpu.dimension_semantics<parallel>], iteration_bounds = array<i64: 2>, scalar_prefetch = 0 : i64, scratch_operands = 0 : i64, tpu.core_type = #tpu.core_type<tc>, window_params = [{transform_indices = @transform_0, window_bounds = array<i64: 1, 16, 128>}, {pipeline_mode = #tpu.pipeline_mode<synchronous>, transform_indices = @transform_1, window_bounds = array<i64: 16, 16>}, {pipeline_mode = #tpu.pipeline_mode<synchronous>, transform_indices = @transform_2, window_bounds = array<i64: 16, 1>}, {pipeline_mode = #tpu.pipeline_mode<synchronous>, transform_indices = @transform_3, window_bounds = array<i64: 16, 3>}, {pipeline_mode = #tpu.pipeline_mode<synchronous>, transform_indices = @transform_4, window_bounds = array<i64: 16, 1>}, {pipeline_mode = #tpu.pipeline_mode<synchronous>, transform_indices = @transform_5, window_bounds = array<i64: 16, 3>}, {pipeline_mode = #tpu.pipeline_mode<synchronous>, transform_indices = @transform_6, window_bounds = array<i64: 16, 1>}, {transform_indices = @transform_7, window_bounds = array<i64: 1, 32, 128>}]} {
    %c0 = arith.constant 0 : index
    %c0_0 = arith.constant 0 : index
    %0 = vector.load %arg2[%c0, %c0_0] : memref<16x16xbf16, #tpu.memory_space<vmem>>, vector<16x16xbf16>
    %c0_1 = arith.constant 0 : index
    %c0_2 = arith.constant 0 : index
    %1 = vector.load %arg3[%c0_1, %c0_2] : memref<16x1xf32, #tpu.memory_space<vmem>>, vector<16x1xf32>
    %c0_3 = arith.constant 0 : index
    %c0_4 = arith.constant 0 : index
    %2 = vector.load %arg4[%c0_3, %c0_4] : memref<16x3xf32, #tpu.memory_space<vmem>>, vector<16x3xf32>
    %c0_5 = arith.constant 0 : index
    %c0_6 = arith.constant 0 : index
    %3 = vector.load %arg5[%c0_5, %c0_6] : memref<16x1xf32, #tpu.memory_space<vmem>>, vector<16x1xf32>
    %c0_7 = arith.constant 0 : index
    %c0_8 = arith.constant 0 : index
    %4 = vector.load %arg6[%c0_7, %c0_8] : memref<16x3xf32, #tpu.memory_space<vmem>>, vector<16x3xf32>
    %c0_9 = arith.constant 0 : index
    %c0_10 = arith.constant 0 : index
    %5 = vector.load %arg7[%c0_9, %c0_10] : memref<16x1xf32, #tpu.memory_space<vmem>>, vector<16x1xf32>
    %6 = tpu.iota {dimensions = array<i32: 1>} : vector<1x128xi32>
    %c2_i32 = arith.constant 2 : i32
    %7 = vector.broadcast %c2_i32 : i32 to vector<1x128xi32>
    %8 = arith.cmpi sge, %6, %7 : vector<1x128xi32>
    %c126_i32 = arith.constant 126 : i32
    %9 = vector.broadcast %c126_i32 : i32 to vector<1x128xi32>
    %10 = arith.cmpi slt, %6, %9 : vector<1x128xi32>
    %c4_i32 = arith.constant 4 : i32
    %11 = vector.broadcast %c4_i32 : i32 to vector<1x128xi32>
    %12 = arith.cmpi sge, %6, %11 : vector<1x128xi32>
    %c124_i32 = arith.constant 124 : i32
    %13 = vector.broadcast %c124_i32 : i32 to vector<1x128xi32>
    %14 = arith.cmpi slt, %6, %13 : vector<1x128xi32>
    %c0_11 = arith.constant 0 : index
    %c0_12 = arith.constant 0 : index
    %c0_13 = arith.constant 0 : index
    %15 = vector.load %arg1[%c0_11, %c0_12, %c0_13] : memref<1x16x128xbf16, #tpu.memory_space<vmem>>, vector<1x16x128xbf16>
    %16 = vector.shape_cast %15 : vector<1x16x128xbf16> to vector<16x128xbf16>
    %cst = arith.constant dense<0.000000e+00> : vector<16x128xf32>
    %17 = tpu.matmul %0, %16, %cst {dimension_numbers = #tpu.dot_dimension_numbers<[1], [0], [0], [1], [0, 0, 1, 1], [], []>} : vector<16x16xbf16>, vector<16x128xbf16>, vector<16x128xf32> -> vector<16x128xf32>
    %18 = vector.broadcast %1 : vector<16x1xf32> to vector<16x128xf32>
    %19 = arith.addf %17, %18 : vector<16x128xf32>
    %c2_i32_14 = arith.constant 2 : i32
    %20 = tpu.dynamic_rotate %19 by %c2_i32_14 dim 1 : vector<16x128xf32>, i32 -> vector<16x128xf32>
    %cst_15 = arith.constant 0.000000e+00 : f32
    %21 = vector.shape_cast %8 : vector<1x128xi1> to vector<1x128xi1>
    %22 = vector.broadcast %21 : vector<1x128xi1> to vector<16x128xi1>
    %23 = vector.broadcast %cst_15 : f32 to vector<16x128xf32>
    %24 = arith.select %22, %20, %23 : vector<16x128xi1>, vector<16x128xf32>
    %c126_i32_16 = arith.constant 126 : i32
    %25 = tpu.dynamic_rotate %19 by %c126_i32_16 dim 1 : vector<16x128xf32>, i32 -> vector<16x128xf32>
    %cst_17 = arith.constant 0.000000e+00 : f32
    %26 = vector.shape_cast %10 : vector<1x128xi1> to vector<1x128xi1>
    %27 = vector.broadcast %26 : vector<1x128xi1> to vector<16x128xi1>
    %28 = vector.broadcast %cst_17 : f32 to vector<16x128xf32>
    %29 = arith.select %27, %25, %28 : vector<16x128xi1>, vector<16x128xf32>
    %30 = vector.extract_strided_slice %2 {offsets = [0, 0], sizes = [16, 1], strides = [1, 1]} : vector<16x3xf32> to vector<16x1xf32>
    %31 = vector.broadcast %30 : vector<16x1xf32> to vector<16x128xf32>
    %32 = arith.mulf %31, %24 : vector<16x128xf32>
    %33 = vector.extract_strided_slice %2 {offsets = [0, 1], sizes = [16, 1], strides = [1, 1]} : vector<16x3xf32> to vector<16x1xf32>
    %34 = vector.broadcast %33 : vector<16x1xf32> to vector<16x128xf32>
    %35 = arith.mulf %34, %19 : vector<16x128xf32>
    %36 = arith.addf %32, %35 : vector<16x128xf32>
    %37 = vector.extract_strided_slice %2 {offsets = [0, 2], sizes = [16, 1], strides = [1, 1]} : vector<16x3xf32> to vector<16x1xf32>
    %38 = vector.broadcast %37 : vector<16x1xf32> to vector<16x128xf32>
    %39 = arith.mulf %38, %29 : vector<16x128xf32>
    %40 = arith.addf %36, %39 : vector<16x128xf32>
    %41 = vector.broadcast %3 : vector<16x1xf32> to vector<16x128xf32>
    %42 = arith.addf %40, %41 : vector<16x128xf32>
    %c4_i32_18 = arith.constant 4 : i32
    %43 = tpu.dynamic_rotate %42 by %c4_i32_18 dim 1 : vector<16x128xf32>, i32 -> vector<16x128xf32>
    %cst_19 = arith.constant 0.000000e+00 : f32
    %44 = vector.shape_cast %12 : vector<1x128xi1> to vector<1x128xi1>
    %45 = vector.broadcast %44 : vector<1x128xi1> to vector<16x128xi1>
    %46 = vector.broadcast %cst_19 : f32 to vector<16x128xf32>
    %47 = arith.select %45, %43, %46 : vector<16x128xi1>, vector<16x128xf32>
    %c124_i32_20 = arith.constant 124 : i32
    %48 = tpu.dynamic_rotate %42 by %c124_i32_20 dim 1 : vector<16x128xf32>, i32 -> vector<16x128xf32>
    %cst_21 = arith.constant 0.000000e+00 : f32
    %49 = vector.shape_cast %14 : vector<1x128xi1> to vector<1x128xi1>
    %50 = vector.broadcast %49 : vector<1x128xi1> to vector<16x128xi1>
    %51 = vector.broadcast %cst_21 : f32 to vector<16x128xf32>
    %52 = arith.select %50, %48, %51 : vector<16x128xi1>, vector<16x128xf32>
    %53 = vector.extract_strided_slice %4 {offsets = [0, 0], sizes = [16, 1], strides = [1, 1]} : vector<16x3xf32> to vector<16x1xf32>
    %54 = vector.broadcast %53 : vector<16x1xf32> to vector<16x128xf32>
    %55 = arith.mulf %54, %47 : vector<16x128xf32>
    %56 = vector.extract_strided_slice %4 {offsets = [0, 1], sizes = [16, 1], strides = [1, 1]} : vector<16x3xf32> to vector<16x1xf32>
    %57 = vector.broadcast %56 : vector<16x1xf32> to vector<16x128xf32>
    %58 = arith.mulf %57, %42 : vector<16x128xf32>
    %59 = arith.addf %55, %58 : vector<16x128xf32>
    %60 = vector.extract_strided_slice %4 {offsets = [0, 2], sizes = [16, 1], strides = [1, 1]} : vector<16x3xf32> to vector<16x1xf32>
    %61 = vector.broadcast %60 : vector<16x1xf32> to vector<16x128xf32>
    %62 = arith.mulf %61, %52 : vector<16x128xf32>
    %63 = arith.addf %59, %62 : vector<16x128xf32>
    %64 = vector.broadcast %5 : vector<16x1xf32> to vector<16x128xf32>
    %65 = arith.addf %63, %64 : vector<16x128xf32>
    %c0_22 = arith.constant 0 : index
    %c0_23 = arith.constant 0 : index
    %c0_24 = arith.constant 0 : index
    %66 = vector.load %arg8[%c0_22, %c0_23, %c0_24] : memref<1x32x128xf32, #tpu.memory_space<vmem>>, vector<1x16x128xf32>
    %67 = vector.shape_cast %66 : vector<1x16x128xf32> to vector<16x128xf32>
    %68 = vector.shape_cast %42 : vector<16x128xf32> to vector<1x16x128xf32>
    tpu.vector_store %arg8[%c0_22, %c0_23, %c0_24], %68 {strides = array<i32>} : memref<1x32x128xf32, #tpu.memory_space<vmem>>, vector<1x16x128xf32>,
    %c0_25 = arith.constant 0 : index
    %c16 = arith.constant 16 : index
    %c0_26 = arith.constant 0 : index
    %69 = vector.load %arg8[%c0_25, %c16, %c0_26] : memref<1x32x128xf32, #tpu.memory_space<vmem>>, vector<1x16x128xf32>
    %70 = vector.shape_cast %69 : vector<1x16x128xf32> to vector<16x128xf32>
    %71 = vector.shape_cast %65 : vector<16x128xf32> to vector<1x16x128xf32>
    tpu.vector_store %arg8[%c0_25, %c16, %c0_26], %71 {strides = array<i32>} : memref<1x32x128xf32, #tpu.memory_space<vmem>>, vector<1x16x128xf32>,
    return
  }
  func.func @transform_0(%arg0: i32) -> (i32, i32, i32) {
    %c0_i32 = arith.constant 0 : i32
    %c0_i32_0 = arith.constant 0 : i32
    %c0_i32_1 = arith.constant 0 : i32
    return %arg0, %c0_i32, %c0_i32_0 : i32, i32, i32
  }
  func.func @transform_1(%arg0: i32) -> (i32, i32) {
    %c0_i32 = arith.constant 0 : i32
    %c0_i32_0 = arith.constant 0 : i32
    %c0_i32_1 = arith.constant 0 : i32
    return %c0_i32, %c0_i32_0 : i32, i32
  }
  func.func @transform_2(%arg0: i32) -> (i32, i32) {
    %c0_i32 = arith.constant 0 : i32
    %c0_i32_0 = arith.constant 0 : i32
    %c0_i32_1 = arith.constant 0 : i32
    return %c0_i32, %c0_i32_0 : i32, i32
  }
  func.func @transform_3(%arg0: i32) -> (i32, i32) {
    %c0_i32 = arith.constant 0 : i32
    %c0_i32_0 = arith.constant 0 : i32
    %c0_i32_1 = arith.constant 0 : i32
    return %c0_i32, %c0_i32_0 : i32, i32
  }
  func.func @transform_4(%arg0: i32) -> (i32, i32) {
    %c0_i32 = arith.constant 0 : i32
    %c0_i32_0 = arith.constant 0 : i32
    %c0_i32_1 = arith.constant 0 : i32
    return %c0_i32, %c0_i32_0 : i32, i32
  }
  func.func @transform_5(%arg0: i32) -> (i32, i32) {
    %c0_i32 = arith.constant 0 : i32
    %c0_i32_0 = arith.constant 0 : i32
    %c0_i32_1 = arith.constant 0 : i32
    return %c0_i32, %c0_i32_0 : i32, i32
  }
  func.func @transform_6(%arg0: i32) -> (i32, i32) {
    %c0_i32 = arith.constant 0 : i32
    %c0_i32_0 = arith.constant 0 : i32
    %c0_i32_1 = arith.constant 0 : i32
    return %c0_i32, %c0_i32_0 : i32, i32
  }
  func.func @transform_7(%arg0: i32) -> (i32, i32, i32) {
    %c0_i32 = arith.constant 0 : i32
    %c0_i32_0 = arith.constant 0 : i32
    %c0_i32_1 = arith.constant 0 : i32
    return %arg0, %c0_i32, %c0_i32_0 : i32, i32, i32
  }
}

</mosaic_0001>

<llo_original>
// kernel: tpu_custom_call.1
$region0: #{tpu_custom_call.1}
  #allocation0 [shape = 'u32[]', space=smem, size = 0x4, offset = 0x4, fixed_abs, tag = 'smem constant byte address 0x4 - core index']
  #allocation1 [shape = 'u32[144,128]{1,0:T(1,128)}', space=vmem, size = 0x12000, scoped, tag = 'internal scratch']
  %s0 = inlined_call_operand.vmem [shape: bf16[2,16,128], index: 0, kind: input, shape index: {}]
  %s1 = inlined_call_operand.vmem [shape: bf16[16,16], index: 1, kind: input, shape index: {}]
  %s2 = inlined_call_operand.vmem [shape: f32[16,1], index: 2, kind: input, shape index: {}]
  %s3 = inlined_call_operand.vmem [shape: f32[16,3], index: 3, kind: input, shape index: {}]
  %s4 = inlined_call_operand.vmem [shape: f32[16,1], index: 4, kind: input, shape index: {}]
  %s5 = inlined_call_operand.vmem [shape: f32[16,3], index: 5, kind: input, shape index: {}]
  %s6 = inlined_call_operand.vmem [shape: f32[16,1], index: 6, kind: input, shape index: {}]
  %s7 = inlined_call_operand.hbm [shape: f32[2,32,128], index: 7, kind: output, shape index: {}]
  %s8 = sld [smem:[#allocation0]]
  $region61: #{tpu_custom_call.1} parent=0
    _
  %s10 = ssub.s32 1, %s8
  %s11 = scalar_select 0, %s10, %s8
  $region1: #{tpu_custom_call.1} parent=0
    #allocation2 [shape = 'u8[32768]{0}', space=vmem, size = 0x8000, scoped, tag = 'output window, operand 0']
    #allocation3 [shape = 's32[2]{0}', space=sflag, size = 0x8, scoped, tag = 'scoped memory for tpu_custom_call.1']
    %12 = vsyncpa [#allocation3], 0
    %s13 = scalar_lea.sflag [#allocation3], 1
    %14 = vsyncpa %s13, 0
    loop: start=0, step=1, limit=4
    $region2: #{tpu_custom_call.1} parent=1 // loop_pre_header
      _
    $region3: #{tpu_custom_call.1} parent=1 // loop_header
      %s16 = sphi 0, %s20
      %p17 = scmp.ge.s32.totalorder %s16, 4
      %s26 = sphi 0, %s28
      %s29 = sphi 0, %s26
      %s30 = sphi 0, %s29
      %s46 = sphi 0, %s30
      %s50 = sphi 0, %s50
      %s52 = sphi 0, %s50
      %s53 = sphi 0, %s52
      %s67 = sphi 0, %s53
      %s71 = sphi 0, %s71
      %s73 = sphi 0, %s71
      %s74 = sphi 0, %s73
      %s88 = sphi 0, %s74
      %s92 = sphi 0, %s92
      %s94 = sphi 0, %s92
      %s95 = sphi 0, %s94
      %s109 = sphi 0, %s95
      %s113 = sphi 0, %s113
      %s115 = sphi 0, %s113
      %s116 = sphi 0, %s115
      %s130 = sphi 0, %s116
      %s134 = sphi 0, %s134
      %s136 = sphi 0, %s134
      %s137 = sphi 0, %s136
      %s151 = sphi 0, %s137
      %s155 = sphi 0, %s155
      %s157 = sphi 0, %s155
      %s158 = sphi 0, %s157
      %s172 = sphi 0, %s158
      %s178 = sphi 0, %s180
      %s181 = sphi 0, %s178
      %s182 = sphi 0, %s181
      %s198 = sphi 0, %s182
    $region4: #{tpu_custom_call.1} parent=1 // loop_header_branch
      %19 = sbr.rel (%p17) target = $region8
    $region5: #{tpu_custom_call.1} parent=1 // loop_body
      %s21 = ssub.s32 %s16, 1
      %s22 = ssub.s32 %s16, 2
      %s23 = sadd.s32 %s16, 1
      %s24 = ssub.s32 %s16, %s23
      %p25 = scmp.eq.s32.totalorder %s24, 0
      %s27 = sadd.s32 %s26, 1
      %s28 = scalar_select %p25, %s26, %s27
      %p31 = pneg %p25
      %p32 = scmp.eq.s32.totalorder %s16, 1
      %p33 = por %p31, %p32
      %p34 = scmp.ne.s32.totalorder %s26, %s29
      %p35 = scmp.eq.s32.totalorder %s16, 0
      %p36 = por %p34, %p35
      %p37 = scmp.ne.s32.totalorder %s26, %s29
      %p38 = scmp.eq.s32.totalorder %s21, 1
      %p39 = por %p37, %p38
      %p40 = scmp.ne.s32.totalorder %s29, %s30
      %p41 = scmp.eq.s32.totalorder %s21, 0
      %p42 = por %p40, %p41
      %p43 = scmp.ne.s32.totalorder %s29, %s30
      %p44 = scmp.eq.s32.totalorder %s22, 1
      %p45 = por %p43, %p44
      %p47 = scmp.ne.s32.totalorder %s30, %s46
      %p48 = scmp.eq.s32.totalorder %s22, 0
      %p49 = por %p47, %p48
      %s51 = sadd.s32 %s50, 1
      %p54 = scmp.eq.s32.totalorder %s16, 1
      %p55 = scmp.ne.s32.totalorder %s50, %s52
      %p56 = scmp.eq.s32.totalorder %s16, 0
      %p57 = por %p55, %p56
      %p58 = scmp.ne.s32.totalorder %s50, %s52
      %p59 = scmp.eq.s32.totalorder %s21, 1
      %p60 = por %p58, %p59
      %p61 = scmp.ne.s32.totalorder %s52, %s53
      %p62 = scmp.eq.s32.totalorder %s21, 0
      %p63 = por %p61, %p62
      %p64 = scmp.ne.s32.totalorder %s52, %s53
      %p65 = scmp.eq.s32.totalorder %s22, 1
      %p66 = por %p64, %p65
      %p68 = scmp.ne.s32.totalorder %s53, %s67
      %p69 = scmp.eq.s32.totalorder %s22, 0
      %p70 = por %p68, %p69
      %s72 = sadd.s32 %s71, 1
      %p75 = scmp.eq.s32.totalorder %s16, 1
      %p76 = scmp.ne.s32.totalorder %s71, %s73
      %p77 = scmp.eq.s32.totalorder %s16, 0
      %p78 = por %p76, %p77
      %p79 = scmp.ne.s32.totalorder %s71, %s73
      %p80 = scmp.eq.s32.totalorder %s21, 1
      %p81 = por %p79, %p80
      %p82 = scmp.ne.s32.totalorder %s73, %s74
      %p83 = scmp.eq.s32.totalorder %s21, 0
      %p84 = por %p82, %p83
      %p85 = scmp.ne.s32.totalorder %s73, %s74
      %p86 = scmp.eq.s32.totalorder %s22, 1
      %p87 = por %p85, %p86
      %p89 = scmp.ne.s32.totalorder %s74, %s88
      %p90 = scmp.eq.s32.totalorder %s22, 0
      %p91 = por %p89, %p90
      %s93 = sadd.s32 %s92, 1
      %p96 = scmp.eq.s32.totalorder %s16, 1
      %p97 = scmp.ne.s32.totalorder %s92, %s94
      %p98 = scmp.eq.s32.totalorder %s16, 0
      %p99 = por %p97, %p98
      %p100 = scmp.ne.s32.totalorder %s92, %s94
      %p101 = scmp.eq.s32.totalorder %s21, 1
      %p102 = por %p100, %p101
      %p103 = scmp.ne.s32.totalorder %s94, %s95
      %p104 = scmp.eq.s32.totalorder %s21, 0
      %p105 = por %p103, %p104
      %p106 = scmp.ne.s32.totalorder %s94, %s95
      %p107 = scmp.eq.s32.totalorder %s22, 1
      %p108 = por %p106, %p107
      %p110 = scmp.ne.s32.totalorder %s95, %s109
      %p111 = scmp.eq.s32.totalorder %s22, 0
      %p112 = por %p110, %p111
      %s114 = sadd.s32 %s113, 1
      %p117 = scmp.eq.s32.totalorder %s16, 1
      %p118 = scmp.ne.s32.totalorder %s113, %s115
      %p119 = scmp.eq.s32.totalorder %s16, 0
      %p120 = por %p118, %p119
      %p121 = scmp.ne.s32.totalorder %s113, %s115
      %p122 = scmp.eq.s32.totalorder %s21, 1
      %p123 = por %p121, %p122
      %p124 = scmp.ne.s32.totalorder %s115, %s116
      %p125 = scmp.eq.s32.totalorder %s21, 0
      %p126 = por %p124, %p125
      %p127 = scmp.ne.s32.totalorder %s115, %s116
      %p128 = scmp.eq.s32.totalorder %s22, 1
      %p129 = por %p127, %p128
      %p131 = scmp.ne.s32.totalorder %s116, %s130
      %p132 = scmp.eq.s32.totalorder %s22, 0
      %p133 = por %p131, %p132
      %s135 = sadd.s32 %s134, 1
      %p138 = scmp.eq.s32.totalorder %s16, 1
      %p139 = scmp.ne.s32.totalorder %s134, %s136
      %p140 = scmp.eq.s32.totalorder %s16, 0
      %p141 = por %p139, %p140
      %p142 = scmp.ne.s32.totalorder %s134, %s136
      %p143 = scmp.eq.s32.totalorder %s21, 1
      %p144 = por %p142, %p143
      %p145 = scmp.ne.s32.totalorder %s136, %s137
      %p146 = scmp.eq.s32.totalorder %s21, 0
      %p147 = por %p145, %p146
      %p148 = scmp.ne.s32.totalorder %s136, %s137
      %p149 = scmp.eq.s32.totalorder %s22, 1
      %p150 = por %p148, %p149
      %p152 = scmp.ne.s32.totalorder %s137, %s151
      %p153 = scmp.eq.s32.totalorder %s22, 0
      %p154 = por %p152, %p153
      %s156 = sadd.s32 %s155, 1
      %p159 = scmp.eq.s32.totalorder %s16, 1
      %p160 = scmp.ne.s32.totalorder %s155, %s157
      %p161 = scmp.eq.s32.totalorder %s16, 0
      %p162 = por %p160, %p161
      %p163 = scmp.ne.s32.totalorder %s155, %s157
      %p164 = scmp.eq.s32.totalorder %s21, 1
      %p165 = por %p163, %p164
      %p166 = scmp.ne.s32.totalorder %s157, %s158
      %p167 = scmp.eq.s32.totalorder %s21, 0
      %p168 = por %p166, %p167
      %p169 = scmp.ne.s32.totalorder %s157, %s158
      %p170 = scmp.eq.s32.totalorder %s22, 1
      %p171 = por %p169, %p170
      %p173 = scmp.ne.s32.totalorder %s158, %s172
      %p174 = scmp.eq.s32.totalorder %s22, 0
      %p175 = por %p173, %p174
      %s176 = ssub.s32 %s16, %s23
      %p177 = scmp.eq.s32.totalorder %s176, 0
      %s179 = sadd.s32 %s178, 1
      %s180 = scalar_select %p177, %s178, %s179
      %p183 = pneg %p177
      %p184 = scmp.eq.s32.totalorder %s16, 1
      %p185 = por %p183, %p184
      %p186 = scmp.ne.s32.totalorder %s178, %s181
      %p187 = scmp.eq.s32.totalorder %s16, 0
      %p188 = por %p186, %p187
      %p189 = scmp.ne.s32.totalorder %s178, %s181
      %p190 = scmp.eq.s32.totalorder %s21, 1
      %p191 = por %p189, %p190
      %p192 = scmp.ne.s32.totalorder %s181, %s182
      %p193 = scmp.eq.s32.totalorder %s21, 0
      %p194 = por %p192, %p193
      %p195 = scmp.ne.s32.totalorder %s181, %s182
      %p196 = scmp.eq.s32.totalorder %s22, 1
      %p197 = por %p195, %p196
      %p199 = scmp.ne.s32.totalorder %s182, %s198
      %p200 = scmp.eq.s32.totalorder %s22, 0
      %p201 = por %p199, %p200
      %p202 = scmp.le.s32.totalorder 1, %s16
      %p203 = scmp.lt.s32.totalorder %s16, 3
      %p204 = pnand %p202, %p203
      %p205 = pneg %p204
      // Predicated region
      $region9: #{tpu_custom_call.1} parent=5 // pred_check
        _
      $region10: #{tpu_custom_call.1} parent=5 // pred_check_branch
        %207 = sbr.rel (%p204) target = $region12
      $region11: #{tpu_custom_call.1} parent=5 // pred_region
        %s208 = ssub.s32 %s16, 1
        // Predicated region
        $region13: #{tpu_custom_call.1} parent=11 // pred_check
          %p209 = pneg %p63
        $region14: #{tpu_custom_call.1} parent=11 // pred_check_branch
          %211 = sbr.rel (%p209) target = $region16
        $region15: #{tpu_custom_call.1} parent=11 // pred_region
          _
        $region16: #{tpu_custom_call.1} parent=11 // pred_fallthru
          _
        // Predicated region
        $region17: #{tpu_custom_call.1} parent=11 // pred_check
          %p212 = pneg %p84
        $region18: #{tpu_custom_call.1} parent=11 // pred_check_branch
          %214 = sbr.rel (%p212) target = $region20
        $region19: #{tpu_custom_call.1} parent=11 // pred_region
          _
        $region20: #{tpu_custom_call.1} parent=11 // pred_fallthru
          _
        // Predicated region
        $region21: #{tpu_custom_call.1} parent=11 // pred_check
          %p215 = pneg %p105
        $region22: #{tpu_custom_call.1} parent=11 // pred_check_branch
          %217 = sbr.rel (%p215) target = $region24
        $region23: #{tpu_custom_call.1} parent=11 // pred_region
          _
        $region24: #{tpu_custom_call.1} parent=11 // pred_fallthru
          _
        // Predicated region
        $region25: #{tpu_custom_call.1} parent=11 // pred_check
          %p218 = pneg %p126
        $region26: #{tpu_custom_call.1} parent=11 // pred_check_branch
          %220 = sbr.rel (%p218) target = $region28
        $region27: #{tpu_custom_call.1} parent=11 // pred_region
          _
        $region28: #{tpu_custom_call.1} parent=11 // pred_fallthru
          _
        // Predicated region
        $region29: #{tpu_custom_call.1} parent=11 // pred_check
          %p221 = pneg %p147
        $region30: #{tpu_custom_call.1} parent=11 // pred_check_branch
          %223 = sbr.rel (%p221) target = $region32
        $region31: #{tpu_custom_call.1} parent=11 // pred_region
          _
        $region32: #{tpu_custom_call.1} parent=11 // pred_fallthru
          _
        // Predicated region
        $region33: #{tpu_custom_call.1} parent=11 // pred_check
          %p224 = pneg %p168
        $region34: #{tpu_custom_call.1} parent=11 // pred_check_branch
          %226 = sbr.rel (%p224) target = $region36
        $region35: #{tpu_custom_call.1} parent=11 // pred_region
          _
        $region36: #{tpu_custom_call.1} parent=11 // pred_fallthru
          _
      $region12: #{tpu_custom_call.1} parent=5 // pred_fallthru
        _
      %p227 = scmp.lt.s32.totalorder %s16, 2
      // Predicated region
      $region37: #{tpu_custom_call.1} parent=5 // pred_check
        %p228 = pneg %p227
      $region38: #{tpu_custom_call.1} parent=5 // pred_check_branch
        %230 = sbr.rel (%p228) target = $region40
      $region39: #{tpu_custom_call.1} parent=5 // pred_region
        // Predicated region
        $region41: #{tpu_custom_call.1} parent=39 // pred_check
          %p231 = pneg %p36
        $region42: #{tpu_custom_call.1} parent=39 // pred_check_branch
          %233 = sbr.rel (%p231) target = $region44
        $region43: #{tpu_custom_call.1} parent=39 // pred_region
          %p234 = scmp.lt.s32.totalorder %s16, 1
          %s235 = scalar_select %p234, %s16, 1
          %s236 = smul.addr %s235, 2
          %s237 = smul.addr %s236, 4
          %s238 = scalar_lea.vmem %s0, %s237
        $region44: #{tpu_custom_call.1} parent=39 // pred_fallthru
          _
      $region40: #{tpu_custom_call.1} parent=5 // pred_fallthru
        _
      %p239 = scmp.le.s32.totalorder 1, %s16
      %p240 = scmp.lt.s32.totalorder %s16, 3
      %p241 = pnand %p239, %p240
      %p242 = pneg %p241
      // Predicated region
      $region45: #{tpu_custom_call.1} parent=5 // pred_check
        _
      $region46: #{tpu_custom_call.1} parent=5 // pred_check_branch
        %244 = sbr.rel (%p241) target = $region48
      $region47: #{tpu_custom_call.1} parent=5 // pred_region
        %s245 = ssub.s32 %s16, 1
        %p246 = scmp.lt.s32.totalorder %s21, 1
        %s247 = scalar_select %p246, %s21, 1
        %s248 = smul.addr %s247, 2
        %s249 = smul.addr %s248, 4
        %s250 = scalar_lea.vmem %s0, %s249
        %p251 = pneg %p42
        %p252 = pneg %p39
        %p253 = pneg %p63
        %p254 = pneg %p60
        %p255 = pneg %p84
        %p256 = pneg %p81
        %p257 = pneg %p105
        %p258 = pneg %p102
        %p259 = pneg %p126
        %p260 = pneg %p123
        %p261 = pneg %p147
        %p262 = pneg %p144
        %p263 = pneg %p168
        %p264 = pneg %p165
        %p265 = pneg %p194
        %p266 = pneg %p191
        %s267 = sand.u32 %s181, 1
        %s268 = scalar_lea.sflag [#allocation3], %s267
        %s269 = sand.u32 %s181, 1
        %s270 = smul.addr %s269, 32
        %s271 = scalar_lea.vmem [#allocation2], %s270
        %p272 = scmp.lt.s32.totalorder %s21, 1
        %s273 = scalar_select %p272, %s21, 1
        %s274 = smul.addr %s273, 2
        %s275 = smul.addr %s274, 4
        %s276 = scalar_lea.vmem %s0, %s275
        %v278 = vld [vmem:[%s1] sm:$0xf]
        %v279 = vld [vmem:[%s1 + $0x4] sm:$0xf]
        %v280 = vld [vmem:[%s2] sm:$0xff]
        %v281 = vld [vmem:[%s2 + $0x8] sm:$0xff]
        %v282 = vld [vmem:[%s3] sm:$0xff]
        %v283 = vld [vmem:[%s3 + $0x8] sm:$0xff]
        %v284 = vld [vmem:[%s4] sm:$0xff]
        %v285 = vld [vmem:[%s4 + $0x8] sm:$0xff]
        %v286 = vld [vmem:[%s5] sm:$0xff]
        %v287 = vld [vmem:[%s5 + $0x8] sm:$0xff]
        %v288 = vld [vmem:[%s6] sm:$0xff]
        %v289 = vld [vmem:[%s6 + $0x8] sm:$0xff]
        %v290 = vlaneseq
        %v291 = vand.u32 %v290, 127
        %vm292 = vcmp.ge.s32.totalorder %v291, 2
        %vm293 = vcmp.lt.s32.totalorder %v291, 126
        %vm294 = vcmp.ge.s32.totalorder %v291, 4
        %vm295 = vcmp.lt.s32.totalorder %v291, 124
        %v296 = vld [vmem:[%s276] sm:$0xf]
        %v297 = vld [vmem:[%s276 + $0x4] sm:$0xf]
        %299 = vset.pattern.permute.xlu0 0
        %300 = vperm.xlu0 %299, %v280
        %v301 = vpop.permute.xlu0 %300
        %304 = vset.pattern.permute.xlu0 0
        %305 = vperm.xlu0 %304, %v281
        %v306 = vpop.permute.xlu0 %305
        %v310 = vunpack.c.l.b16 %v278
        %v311 = vunpack.c.l.b16 %v279
        %v312 = vpack.c.b16 %v311, %v310
        %v315 = vunpack.c.l.b16 %v296
        %v316 = vunpack.c.l.b16 %v297
        %v317 = vpack.c.b16 %v316, %v315
        %vm319 = vcmask 130048
        %v321 = vsel %vm319, %v312, 0
        %323 = vmatprep.subr.bf16.mxu0 0
        %324 = vmatpush1.bf16.msra.mxu0 0
        %325 = vmatprep.subr.bf16.mxu0 0
        %326 = vmatpush1.bf16.msra.mxu0 0
        %327 = vmatprep.subr.bf16.mxu0 0
        %328 = vmatpush1.bf16.msra.mxu0 0
        %329 = vmatprep.subr.bf16.mxu0 0
        %330 = vmatpush1.bf16.msra.mxu0 0
        %331 = vmatprep.subr.bf16.mxu0 0
        %332 = vmatpush1.bf16.msra.mxu0 0
        %333 = vmatprep.subr.bf16.mxu0 0
        %334 = vmatpush1.bf16.msra.mxu0 0
        %335 = vmatprep.subr.bf16.mxu0 0
        %336 = vmatpush1.bf16.msra.mxu0 0
        %337 = vmatprep.subr.bf16.mxu0 0
        %338 = vmatpush1.bf16.msra.mxu0 %v317
        %339 = vmatprep.subr.bf16.mxu0 0
        %340 = vmatpush2.bf16.msra.mxu0 0
        %341 = vmatprep.subr.bf16.mxu0 0
        %342 = vmatpush2.bf16.msra.mxu0 0
        %343 = vmatprep.subr.bf16.mxu0 0
        %344 = vmatpush2.bf16.msra.mxu0 0
        %345 = vmatprep.subr.bf16.mxu0 0
        %346 = vmatpush2.bf16.msra.mxu0 0
        %347 = vmatprep.subr.bf16.mxu0 0
        %348 = vmatpush2.bf16.msra.mxu0 0
        %349 = vmatprep.subr.bf16.mxu0 0
        %350 = vmatpush2.bf16.msra.mxu0 0
        %351 = vmatprep.subr.bf16.mxu0 0
        %352 = vmatpush2.bf16.msra.mxu0 0
        %353 = vmatprep.subr.bf16.mxu0 0
        %354 = vmatpush2.bf16.msra.mxu0 0
        %355 = vmatprep.mubr.bf16.mxu0 0
        %356 = vmatmul.mubr.bf16.gmra.mxu0 %v321
        %v357 = vpop.f32.mrf.mxu0
        %v358 = vadd.f32 %v301, %v357
        %v359 = vpop.f32.mrf.mxu0
        %v360 = vpop.f32.mrf.mxu0
        %v361 = vadd.f32 %v306, %v360
        %v362 = vpop.f32.mrf.mxu0
        %363 = vdwg.mxu0
        %364 = vrot.lane.b32.xlu0 %v358, 2
        %v365 = vpop.permute.xlu0 %364
        %366 = vrot.lane.b32.xlu0 %v361, 2
        %v367 = vpop.permute.xlu0 %366
        %v368 = vsel %vm292, 1, 0
        %vm369 = vcmp.eq.s32.totalorder %v368, 1
        %v370 = vsel %vm369, %v365, 0.0
        %v371 = vsel %vm369, %v367, 0.0
        %372 = vrot.lane.b32.xlu0 %v358, 126
        %v373 = vpop.permute.xlu0 %372
        %374 = vrot.lane.b32.xlu0 %v361, 126
        %v375 = vpop.permute.xlu0 %374
        %v376 = vsel %vm293, 1, 0
        %vm377 = vcmp.eq.s32.totalorder %v376, 1
        %v378 = vsel %vm377, %v373, 0.0
        %v379 = vsel %vm377, %v375, 0.0
        %381 = vset.pattern.permute.xlu0 0
        %382 = vperm.xlu0 %381, %v282
        %v383 = vpop.permute.xlu0 %382
        %386 = vset.pattern.permute.xlu0 0
        %387 = vperm.xlu0 %386, %v283
        %v388 = vpop.permute.xlu0 %387
        %v390 = vmul.f32 %v383, %v370
        %v391 = vmul.f32 %v388, %v371
        %392 = vset.pattern.permute.xlu0 1
        %393 = vperm.xlu0 %392, %v282
        %v394 = vpop.permute.xlu0 %393
        %396 = vset.pattern.permute.xlu0 1
        %397 = vperm.xlu0 %396, %v283
        %v398 = vpop.permute.xlu0 %397
        %v400 = vmul.f32 %v394, %v358
        %v401 = vmul.f32 %v398, %v361
        %v402 = vadd.f32 %v390, %v400
        %v403 = vadd.f32 %v391, %v401
        %404 = vset.pattern.permute.xlu0 2
        %405 = vperm.xlu0 %404, %v282
        %v406 = vpop.permute.xlu0 %405
        %408 = vset.pattern.permute.xlu0 2
        %409 = vperm.xlu0 %408, %v283
        %v410 = vpop.permute.xlu0 %409
        %v412 = vmul.f32 %v406, %v378
        %v413 = vmul.f32 %v410, %v379
        %v414 = vadd.f32 %v402, %v412
        %v415 = vadd.f32 %v403, %v413
        %417 = vset.pattern.permute.xlu0 0
        %418 = vperm.xlu0 %417, %v284
        %v419 = vpop.permute.xlu0 %418
        %422 = vset.pattern.permute.xlu0 0
        %423 = vperm.xlu0 %422, %v285
        %v424 = vpop.permute.xlu0 %423
        %v426 = vadd.f32 %v414, %v419
        %v427 = vadd.f32 %v415, %v424
        %428 = vrot.lane.b32.xlu0 %v426, 4
        %v429 = vpop.permute.xlu0 %428
        %430 = vrot.lane.b32.xlu0 %v427, 4
        %v431 = vpop.permute.xlu0 %430
        %v432 = vsel %vm294, 1, 0
        %vm433 = vcmp.eq.s32.totalorder %v432, 1
        %v434 = vsel %vm433, %v429, 0.0
        %v435 = vsel %vm433, %v431, 0.0
        %436 = vrot.lane.b32.xlu0 %v426, 124
        %v437 = vpop.permute.xlu0 %436
        %438 = vrot.lane.b32.xlu0 %v427, 124
        %v439 = vpop.permute.xlu0 %438
        %v440 = vsel %vm295, 1, 0
        %vm441 = vcmp.eq.s32.totalorder %v440, 1
        %v442 = vsel %vm441, %v437, 0.0
        %v443 = vsel %vm441, %v439, 0.0
        %445 = vset.pattern.permute.xlu0 0
        %446 = vperm.xlu0 %445, %v286
        %v447 = vpop.permute.xlu0 %446
        %450 = vset.pattern.permute.xlu0 0
        %451 = vperm.xlu0 %450, %v287
        %v452 = vpop.permute.xlu0 %451
        %v454 = vmul.f32 %v447, %v434
        %v455 = vmul.f32 %v452, %v435
        %456 = vset.pattern.permute.xlu0 1
        %457 = vperm.xlu0 %456, %v286
        %v458 = vpop.permute.xlu0 %457
        %460 = vset.pattern.permute.xlu0 1
        %461 = vperm.xlu0 %460, %v287
        %v462 = vpop.permute.xlu0 %461
        %v464 = vmul.f32 %v458, %v426
        %v465 = vmul.f32 %v462, %v427
        %v466 = vadd.f32 %v454, %v464
        %v467 = vadd.f32 %v455, %v465
        %468 = vset.pattern.permute.xlu0 2
        %469 = vperm.xlu0 %468, %v286
        %v470 = vpop.permute.xlu0 %469
        %472 = vset.pattern.permute.xlu0 2
        %473 = vperm.xlu0 %472, %v287
        %v474 = vpop.permute.xlu0 %473
        %v476 = vmul.f32 %v470, %v442
        %v477 = vmul.f32 %v474, %v443
        %v478 = vadd.f32 %v466, %v476
        %v479 = vadd.f32 %v467, %v477
        %481 = vset.pattern.permute.xlu0 0
        %482 = vperm.xlu0 %481, %v288
        %v483 = vpop.permute.xlu0 %482
        %486 = vset.pattern.permute.xlu0 0
        %487 = vperm.xlu0 %486, %v289
        %v488 = vpop.permute.xlu0 %487
        %v490 = vadd.f32 %v478, %v483
        %v491 = vadd.f32 %v479, %v488
        %492 = vst [vmem:[%s271] sm:$0xff] %v426
        %493 = vst [vmem:[%s271 + $0x8] sm:$0xff] %v427
        %494 = vst [vmem:[%s271 + $0x10] sm:$0xff] %v490
        %495 = vst [vmem:[%s271 + $0x18] sm:$0xff] %v491
        %s496 = sand.u32 %s181, 1
        %s497 = scalar_lea.sflag [#allocation3], %s496
        %s498 = sand.u32 %s181, 1
        %s499 = smul.addr %s498, 32
        %s500 = scalar_lea.vmem [#allocation2], %s499
        // Predicated region
        $region49: #{tpu_custom_call.1} parent=47 // pred_check
          %p501 = pneg %p191
        $region50: #{tpu_custom_call.1} parent=47 // pred_check_branch
          %503 = sbr.rel (%p501) target = $region52
        $region51: #{tpu_custom_call.1} parent=47 // pred_region
          %s505 = ssub.s32 512, 512
          %506 = vsyncadd %s497, %s505
          %s507 = smul.addr %s21, 4
          %s508 = smul.addr %s507, 128
          %s509 = scalar_lea.hbm %s7, %s508
          %s510 = sshll.u32 %s500, 4
          %s511 = int_to_ptr.vmem [resolvable:$true] %s510
          %516 = dma.vmem_to_hbm [thread:$0]  %s511, 512, %s509, %s497, 128, 128, 8
        $region52: #{tpu_custom_call.1} parent=47 // pred_fallthru
          _
      $region48: #{tpu_custom_call.1} parent=5 // pred_fallthru
        _
      %p517 = scmp.le.s32.totalorder 2, %s16
      // Predicated region
      $region53: #{tpu_custom_call.1} parent=5 // pred_check
        %p518 = pneg %p517
      $region54: #{tpu_custom_call.1} parent=5 // pred_check_branch
        %520 = sbr.rel (%p518) target = $region56
      $region55: #{tpu_custom_call.1} parent=5 // pred_region
        %s521 = ssub.s32 %s16, 2
        // Predicated region
        $region57: #{tpu_custom_call.1} parent=55 // pred_check
          %p522 = pneg %p197
        $region58: #{tpu_custom_call.1} parent=55 // pred_check_branch
          %524 = sbr.rel (%p522) target = $region60
        $region59: #{tpu_custom_call.1} parent=55 // pred_region
          %s525 = sand.u32 %s182, 1
          %s526 = scalar_lea.sflag [#allocation3], %s525
          %s527 = sand.u32 %s182, 1
          %s528 = smul.addr %s527, 32
          %s529 = scalar_lea.vmem [#allocation2], %s528
          %530 = dma.done %s526, 512
        $region60: #{tpu_custom_call.1} parent=55 // pred_fallthru
          _
      $region56: #{tpu_custom_call.1} parent=5 // pred_fallthru
        _
    $region6: #{tpu_custom_call.1} parent=1 // loop_footer
      %s20 = sadd.s32 1, %s16
    $region7: #{tpu_custom_call.1} parent=1 // loop_footer_branch
      %15 = sbr.rel target = $region3
    $region8: #{tpu_custom_call.1} parent=1 // loop_exit
      _
    %531 = vsyncpa [#allocation3], 1
    %s532 = scalar_lea.sflag [#allocation3], 1
    %533 = vsyncpa %s532, 1

</llo_original>
